<compile_context>
chip_gen: v5e
topology: v5e:2x2
jax: 0.10.0
libtpu: 0.0.40
codegen_flags: <defaults>
</compile_context>

<pallas_src>
import jax
import jax.numpy as jnp
from jax.experimental import pallas as pl
from jax.experimental.pallas import tpu as pltpu

_LANES = 128
# Per-array VMEM budget for one pipeline buffer (~4 MiB): 3 arrays x 2 buffers
# = 24 MiB sits under v7x's scoped VMEM and near the measured ~85%-of-roofline
# operating point on v5e/v6e/v7x.
_BLOCK_BYTES_BUDGET = 4 * 1024 * 1024
# Never shrink a block below ~1 MiB when adding grid steps: at 3.2 TB/s a
# 1 MiB step is ~1 us of DMA vs ~0.35 us fixed per-step overhead.
_BLOCK_BYTES_FLOOR = 1 * 1024 * 1024
_VMEM_LIMIT_BYTES = 32 * 1024 * 1024
# Below this per-array byte count, let XLA emit (and ideally fuse) the
# subtract into the producing/consuming conv; a standalone streaming kernel
# cannot beat a fused subtract.
_MIN_PALLAS_BYTES = 4 * 1024 * 1024
# >= 4 steps so each v7x TensorCore gets multiple iterations and prologue /
# epilogue DMAs hide behind the pipeline.
_TARGET_GRID_STEPS = 4


def _minus_kernel(a_ref, b_ref, o_ref):
    # Elementwise subtract on the current VMEM tile (VPU).
    o_ref[...] = a_ref[...] - b_ref[...]


def _sublanes_for(dtype):
    """Sublane granularity of one vreg for this dtype (8 f32, 16 bf16, 32 i8)."""
    itemsize = jnp.dtype(dtype).itemsize
    return max(8, 32 // itemsize)


def _round_down(x, m):
    return (x // m) * m


def _round_up(x, m):
    return -(-x // m) * m


def _pick_slab_and_tile(n, itemsize, sublanes):
    """Choose (rows, cols, tile_rows) for a lane-dense 2D slab of n elements.

    Requires n % (sublanes * 128) == 0.  cols is the widest multiple of 128
    (capped at 4096) such that rows = n // cols stays a multiple of the dtype's
    sublane granularity.  tile_rows is a sublane multiple sized between
    _BLOCK_BYTES_FLOOR and _BLOCK_BYTES_BUDGET; the grid uses pl.cdiv, so
    tile_rows need NOT divide rows (no divisor cliff).
    """
    cols = _LANES
    for cand in (4096, 2048, 1024, 512, 256, 128):
        if n % (cand * sublanes) == 0:
            cols = cand
            break
    rows = n // cols  # multiple of `sublanes` by construction

    row_bytes = cols * itemsize
    budget_rows = max(sublanes, _round_down(_BLOCK_BYTES_BUDGET // row_bytes, sublanes))
    floor_rows = max(sublanes, _round_down(_BLOCK_BYTES_FLOOR // row_bytes, sublanes))

    tile_rows = min(rows, budget_rows)
    # Prefer >= _TARGET_GRID_STEPS steps (pipeline overlap; both v7x TCs busy),
    # but never shrink a block below the ~1 MiB floor.
    if pl.cdiv(rows, tile_rows) < _TARGET_GRID_STEPS:
        want = _round_up(pl.cdiv(rows, _TARGET_GRID_STEPS), sublanes)
        tile_rows = min(tile_rows, max(floor_rows, want))
    tile_rows = max(sublanes, min(tile_rows, rows))
    return rows, cols, tile_rows


def _pallas_minus_2d(a2d, b2d, tile_rows):
    rows, cols = a2d.shape
    grid = (pl.cdiv(rows, tile_rows),)  # ragged last block handled by Pallas
    return pl.pallas_call(
        _minus_kernel,
        out_shape=jax.ShapeDtypeStruct((rows, cols), a2d.dtype),
        grid=grid,
        in_specs=[
            pl.BlockSpec((tile_rows, cols), lambda i: (i, 0)),
            pl.BlockSpec((tile_rows, cols), lambda i: (i, 0)),
        ],
        out_specs=pl.BlockSpec((tile_rows, cols), lambda i: (i, 0)),
        compiler_params=pltpu.CompilerParams(
            # TODO(synk): trace-verify pltpu.CORE_PARALLEL on v7x; plain
            # "parallel" is the portable/safe default for v5e/v6e/v7x.
            dimension_semantics=("parallel",),
            vmem_limit_bytes=_VMEM_LIMIT_BYTES,
        ),
    )(a2d, b2d)


def minus_layer(x, *, force_pallas=False):
    """Pallas equivalent of MinusLayer.forward.

    x is a dict with 'conv1_input' and 'conv2_output' (same shape/dtype, NCHW).
    Returns a NEW dict with 'minus_output' added (no in-place mutation).
    """
    a = x["conv1_input"]
    b = x["conv2_output"]
    assert a.shape == b.shape
    assert a.dtype == b.dtype

    orig_shape = a.shape
    n = a.size
    itemsize = jnp.dtype(a.dtype).itemsize
    sublanes = _sublanes_for(a.dtype)

    aligned = n > 0 and (n % (sublanes * _LANES) == 0)
    big_enough = force_pallas or (n * itemsize >= _MIN_PALLAS_BYTES)

    if aligned and big_enough:
        rows, cols, tile_rows = _pick_slab_and_tile(n, itemsize, sublanes)
        # Contiguous row-major reshape: no data movement, no padding passes.
        a2d = jnp.ravel(a).reshape(rows, cols)
        b2d = jnp.ravel(b).reshape(rows, cols)
        out = _pallas_minus_2d(a2d, b2d, tile_rows).reshape(orig_shape)
    else:
        # Small or non-vreg-aligned inputs: let XLA emit the subtract (and
        # fuse it into the producing/consuming conv when possible).
        out = a - b

    result = dict(x)  # stay functional: don't mutate the caller's dict
    result["minus_output"] = out
    return result


if __name__ == "__main__":
    key = jax.random.PRNGKey(0)
    k1, k2, k3, k4 = jax.random.split(key, 4)

    # Small NCHW shapes consistent with the surrounding conv layers.
    B, C, H, W = 2, 4, 16, 16
    a_small = jax.random.normal(k1, (B, C, H, W), dtype=jnp.float32)
    b_small = jax.random.normal(k2, (B, C, H, W), dtype=jnp.float32)
    ref_small = a_small - b_small

    # 1) Small f32 input forced through the Pallas path (proves the kernel runs).
    y = minus_layer({"conv1_input": a_small, "conv2_output": b_small},
                    force_pallas=True)
    out_small = jax.block_until_ready(y["minus_output"])
    assert out_small.shape == ref_small.shape
    assert out_small.dtype == ref_small.dtype
    assert jnp.allclose(out_small, ref_small, atol=1e-6, rtol=1e-6)

    # 2) Same small input through the default path (XLA fallback below the
    #    4 MiB threshold -> fusable with neighbors in a real network).
    y = minus_layer({"conv1_input": a_small, "conv2_output": b_small})
    out_fb = jax.block_until_ready(y["minus_output"])
    assert jnp.allclose(out_fb, ref_small, atol=1e-6, rtol=1e-6)

    # 3) Small bf16 input forced through Pallas: dtype-aware sublanes (16 rows
    #    per vreg) keep the block a full packed tile.
    a_bf = a_small.astype(jnp.bfloat16)
    b_bf = b_small.astype(jnp.bfloat16)
    y = minus_layer({"conv1_input": a_bf, "conv2_output": b_bf},
                    force_pallas=True)
    out_bf = jax.block_until_ready(y["minus_output"])
    assert out_bf.dtype == jnp.bfloat16
    assert jnp.allclose(out_bf.astype(jnp.float32),
                        (a_bf - b_bf).astype(jnp.float32), atol=1e-2, rtol=1e-2)

    # 4) Larger feature map (4 MiB per array): default path picks the Pallas
    #    wide-slab kernel with 4 grid steps of ~1 MiB blocks each.
    a_big = jax.random.normal(k3, (4, 16, 128, 128), dtype=jnp.float32)
    b_big = jax.random.normal(k4, (4, 16, 128, 128), dtype=jnp.float32)
    y = minus_layer({"conv1_input": a_big, "conv2_output": b_big})
    out_big = jax.block_until_ready(y["minus_output"])
    ref_big = a_big - b_big
    assert jnp.allclose(out_big, ref_big, atol=1e-6, rtol=1e-6)

    print("KERNEL_OK")
</pallas_src>

<mosaic_0001>
module attributes {stable_mosaic.version = 11 : i64} {
  func.func @_minus_kernel(%arg0: i32, %arg1: memref<8x256xf32, #tpu.memory_space<vmem>>, %arg2: memref<8x256xf32, #tpu.memory_space<vmem>>, %arg3: memref<8x256xf32, #tpu.memory_space<vmem>>) attributes {dimension_semantics = [#tpu.dimension_semantics<parallel>], iteration_bounds = array<i64: 1>, scalar_prefetch = 0 : i64, scratch_operands = 0 : i64, tpu.core_type = #tpu.core_type<tc>, window_params = [{transform_indices = @transform_0, window_bounds = array<i64: 8, 256>}, {transform_indices = @transform_1, window_bounds = array<i64: 8, 256>}, {transform_indices = @transform_2, window_bounds = array<i64: 8, 256>}]} {
    %c0 = arith.constant 0 : index
    %c0_0 = arith.constant 0 : index
    %0 = vector.load %arg1[%c0, %c0_0] : memref<8x256xf32, #tpu.memory_space<vmem>>, vector<8x256xf32>
    %c0_1 = arith.constant 0 : index
    %c0_2 = arith.constant 0 : index
    %1 = vector.load %arg2[%c0_1, %c0_2] : memref<8x256xf32, #tpu.memory_space<vmem>>, vector<8x256xf32>
    %2 = arith.subf %0, %1 : vector<8x256xf32>
    %c0_3 = arith.constant 0 : index
    %c0_4 = arith.constant 0 : index
    %3 = vector.load %arg3[%c0_3, %c0_4] : memref<8x256xf32, #tpu.memory_space<vmem>>, vector<8x256xf32>
    tpu.vector_store %arg3[%c0_3, %c0_4], %2 {strides = array<i32>} : memref<8x256xf32, #tpu.memory_space<vmem>>, vector<8x256xf32>,
    return
  }
  func.func @transform_0(%arg0: i32) -> (i32, i32) {
    %c0_i32 = arith.constant 0 : i32
    %c0_i32_0 = arith.constant 0 : i32
    return %arg0, %c0_i32 : i32, i32
  }
  func.func @transform_1(%arg0: i32) -> (i32, i32) {
    %c0_i32 = arith.constant 0 : i32
    %c0_i32_0 = arith.constant 0 : i32
    return %arg0, %c0_i32 : i32, i32
  }
  func.func @transform_2(%arg0: i32) -> (i32, i32) {
    %c0_i32 = arith.constant 0 : i32
    %c0_i32_0 = arith.constant 0 : i32
    return %arg0, %c0_i32 : i32, i32
  }
}

</mosaic_0001>

<llo_original>
// kernel: tpu_custom_call.1
$region0: #{tpu_custom_call.1}
  #allocation0 [shape = 'u32[]', space=smem, size = 0x4, offset = 0x4, fixed_abs, tag = 'smem constant byte address 0x4 - core index']
  #allocation1 [shape = 'u32[72,128]{1,0:T(1,128)}', space=vmem, size = 0x9000, scoped, tag = 'internal scratch']
  %s0 = inlined_call_operand.hbm [shape: f32[8,256], index: 0, kind: input, shape index: {}]
  %s1 = inlined_call_operand.hbm [shape: f32[8,256], index: 1, kind: input, shape index: {}]
  %s2 = inlined_call_operand.hbm [shape: f32[8,256], index: 2, kind: output, shape index: {}]
  %s3 = sld [smem:[#allocation0]]
  $region26: #{tpu_custom_call.1} parent=0
    _
  %s5 = ssub.s32 1, %s3
  %s6 = scalar_select 0, %s5, %s3
  $region1: #{tpu_custom_call.1} parent=0
    #allocation2 [shape = 'u8[8192]{0}', space=vmem, size = 0x2000, scoped, tag = 'input window, operand 0, single buffered']
    #allocation3 [shape = 's32[1]{0}', space=sflag, size = 0x4, scoped, tag = 'scoped memory for tpu_custom_call.1']
    #allocation4 [shape = 's32[1]{0}', space=sflag, size = 0x4, scoped, tag = 'scoped memory for tpu_custom_call.1']
    #allocation5 [shape = 'u8[8192]{0}', space=vmem, size = 0x2000, scoped, tag = 'input window, operand 1, single buffered']
    #allocation6 [shape = 's32[1]{0}', space=sflag, size = 0x4, scoped, tag = 'scoped memory for tpu_custom_call.1']
    #allocation7 [shape = 'u8[8192]{0}', space=vmem, size = 0x2000, scoped, tag = 'output window, operand 0, single buffered']
    %7 = vsyncpa [#allocation3], 0
    %8 = vsyncpa [#allocation6], 0
    %9 = vsyncpa [#allocation4], 0
    // Predicated region
    $region2: #{tpu_custom_call.1} parent=1 // pred_check
      _
    $region3: #{tpu_custom_call.1} parent=1 // pred_check_branch
      %11 = sbr.rel (0) target = $region5
    $region4: #{tpu_custom_call.1} parent=1 // pred_region
      %13 = vsyncadd [#allocation3], 0
      %s15 = sshll.u32 %s0, 4
      %s16 = int_to_ptr.hbm [resolvable:$true] %s15
      %s17 = sshll.u32 [#allocation2], 4
      %s18 = int_to_ptr.vmem [resolvable:$true] %s17
      %20 = dma.hbm_to_vmem [thread:$0]  %s16, 256, %s18, [#allocation3]
    $region5: #{tpu_custom_call.1} parent=1 // pred_fallthru
      _
    // Predicated region
    $region6: #{tpu_custom_call.1} parent=1 // pred_check
      _
    $region7: #{tpu_custom_call.1} parent=1 // pred_check_branch
      %22 = sbr.rel (0) target = $region9
    $region8: #{tpu_custom_call.1} parent=1 // pred_region
      %24 = vsyncadd [#allocation6], 0
      %s26 = sshll.u32 %s1, 4
      %s27 = int_to_ptr.hbm [resolvable:$true] %s26
      %s28 = sshll.u32 [#allocation5], 4
      %s29 = int_to_ptr.vmem [resolvable:$true] %s28
      %31 = dma.hbm_to_vmem [thread:$0]  %s27, 256, %s29, [#allocation6]
    $region9: #{tpu_custom_call.1} parent=1 // pred_fallthru
      _
    // Predicated region
    $region10: #{tpu_custom_call.1} parent=1 // pred_check
      _
    $region11: #{tpu_custom_call.1} parent=1 // pred_check_branch
      %33 = sbr.rel (0) target = $region13
    $region12: #{tpu_custom_call.1} parent=1 // pred_region
      %35 = dma.done [#allocation3], 256
    $region13: #{tpu_custom_call.1} parent=1 // pred_fallthru
      _
    // Predicated region
    $region14: #{tpu_custom_call.1} parent=1 // pred_check
      _
    $region15: #{tpu_custom_call.1} parent=1 // pred_check_branch
      %37 = sbr.rel (0) target = $region17
    $region16: #{tpu_custom_call.1} parent=1 // pred_region
      %39 = dma.done [#allocation6], 256
    $region17: #{tpu_custom_call.1} parent=1 // pred_fallthru
      _
    %v40 = vld [vmem:[#allocation2] sm:$0xff]
    %v41 = vld [vmem:[#allocation2 + $0x8] sm:$0xff]
    %v42 = vld [vmem:[#allocation5] sm:$0xff]
    %v43 = vld [vmem:[#allocation5 + $0x8] sm:$0xff]
    %v44 = vsub.f32 %v40, %v42
    %v45 = vsub.f32 %v41, %v43
    %46 = vst [vmem:[#allocation7] sm:$0xff] %v44
    %47 = vst [vmem:[#allocation7 + $0x8] sm:$0xff] %v45
    // Predicated region
    $region18: #{tpu_custom_call.1} parent=1 // pred_check
      _
    $region19: #{tpu_custom_call.1} parent=1 // pred_check_branch
      %49 = sbr.rel (0) target = $region21
    $region20: #{tpu_custom_call.1} parent=1 // pred_region
      %51 = vsyncadd [#allocation4], 0
      %s53 = sshll.u32 [#allocation7], 4
      %s54 = int_to_ptr.vmem [resolvable:$true] %s53
      %s55 = sshll.u32 %s2, 4
      %s56 = int_to_ptr.hbm [resolvable:$true] %s55
      %58 = dma.vmem_to_hbm [thread:$0]  %s54, 256, %s56, [#allocation4]
    $region21: #{tpu_custom_call.1} parent=1 // pred_fallthru
      _
    // Predicated region
    $region22: #{tpu_custom_call.1} parent=1 // pred_check
      _
    $region23: #{tpu_custom_call.1} parent=1 // pred_check_branch
      %60 = sbr.rel (0) target = $region25
    $region24: #{tpu_custom_call.1} parent=1 // pred_region
      %62 = dma.done [#allocation4], 256
    $region25: #{tpu_custom_call.1} parent=1 // pred_fallthru
      _
    %63 = vsyncpa [#allocation3], 1
    %64 = vsyncpa [#allocation6], 1
    %65 = vsyncpa [#allocation4], 1

</llo_original>
